<compile_context>
chip_gen: v6e
topology: v6e:2x2x1
jax: 0.10.0
libtpu: 0.0.40
codegen_flags: <defaults>
</compile_context>

<pallas_src>
import jax
import jax.numpy as jnp
from jax.experimental import pallas as pl
from jax.experimental.pallas import tpu as pltpu


def _round_up(x, m):
    return ((x + m - 1) // m) * m


def _cdiv(a, b):
    return (a + b - 1) // b


def ffnn_tanh_kernel(x_ref, w1_ref, b1_ref, w2_ref, b2_ref, o_ref):
    # One batch tile: cast (VPU) -> matmul (MXU) -> bias add (VPU, f32) -> tanh (EUP, f32)
    #                 -> matmul (MXU) -> bias add -> store (full-lane vst, consumer dtype).
    x = x_ref[...].astype(w1_ref.dtype)                                   # [TB, InP]
    h = jnp.dot(x, w1_ref[...], preferred_element_type=jnp.float32) + b1_ref[...]
    h = jnp.tanh(h)                                                        # f32 (v5e-safe)
    h = h.astype(w2_ref.dtype)                                             # feed for 2nd MXU pass
    y = jnp.dot(h, w2_ref[...], preferred_element_type=jnp.float32) + b2_ref[...]
    o_ref[...] = y.astype(o_ref.dtype)


def ffnn_tanh(x, w1, b1, w2, b2, *, block_b=1024, compute_dtype=jnp.bfloat16):
    """x: [B, In], w1: [In, H], b1: [1, H] or [H], w2: [H, Out], b2: [1, Out] or [Out].

    Matches torch FFNNtanh.forward. MXU operands use `compute_dtype` (default bf16)
    with f32 accumulation; pass compute_dtype=jnp.float32 for strict f32 parity.
    """
    B, in_dim = x.shape
    hid = w1.shape[1]
    out_dim = w2.shape[1]
    b1 = b1.reshape(1, hid)
    b2 = b2.reshape(1, out_dim)

    out_dtype = x.dtype
    cds = jnp.dtype(compute_dtype).itemsize
    xbytes = jnp.dtype(x.dtype).itemsize
    obytes = jnp.dtype(out_dtype).itemsize

    # --- Lane-dense feature padding (zero padding is exact: padded hidden cols give
    #     tanh(0)=0 and padded w2 rows/cols are 0).
    hid_p = _round_up(hid, 128)
    out_p = _round_up(out_dim, 128)
    # Pad the contraction dim only when large and misaligned (padding tiny in_dim
    # would just inflate x traffic).
    in_p = in_dim if in_dim <= 128 else _round_up(in_dim, 128)

    # --- Per-generation VMEM budget (v7x: 64 MiB physical, v5e/v6e: 128 MiB).
    try:
        vmem_cap = int(pltpu.get_tpu_info().vmem_capacity_bytes)
    except Exception:
        vmem_cap = 64 << 20  # conservative fallback
    vmem_budget = int(vmem_cap * 0.85)  # leave headroom for Mosaic internal scratch

    # --- Derive the batch tile TB from the budget.
    resident = (in_p * hid_p + hid_p * out_p) * cds + (hid_p + out_p) * 4
    per_row = (2 * in_p * xbytes          # streamed x tile (double-buffered, HBM dtype)
               + in_p * cds               # in-kernel compute-dtype copy of x
               + hid_p * (4 + cds)        # f32 hidden + compute-dtype re-cast copy
               + 2 * out_p * obytes)      # output tile (double-buffered)
    # TODO(synk): for very large hidden dims where the resident weights alone exceed the
    # VMEM budget, add a hidden-dim grid axis (stream w1/w2 slices into a (TB, OutP) f32
    # accumulator with pl.when init/finalize) instead of keeping them fully resident.
    avail = max(vmem_budget - 2 * resident - (4 << 20), 0)
    tb_budget = max(avail // per_row, 8)

    b8 = _round_up(B, 8)
    tb = min(block_b, int(tb_budget), b8)
    tb = max(8, (tb // 8) * 8)
    # Guarantee >= 2 grid steps when possible so the "parallel" batch axis can split
    # across v7x's two TensorCores (neutral on v5e/v6e's single core).
    if _cdiv(b8, tb) < 2 and b8 >= 16:
        tb = max(8, _round_up(b8 // 2, 8))
    num_tiles = _cdiv(b8, tb)  # partial last block is fine: rows are independent

    # --- One-time parameter padding/casting (weights -> MXU feed dtype, biases f32).
    xp = x
    if b8 != B or in_p != in_dim:
        xp = jnp.pad(x, ((0, b8 - B), (0, in_p - in_dim)))
    w1p = jnp.pad(w1, ((0, in_p - in_dim), (0, hid_p - hid))).astype(compute_dtype)
    b1p = jnp.pad(b1, ((0, 0), (0, hid_p - hid))).astype(jnp.float32)
    w2p = jnp.pad(w2, ((0, hid_p - hid), (0, out_p - out_dim))).astype(compute_dtype)
    b2p = jnp.pad(b2, ((0, 0), (0, out_p - out_dim))).astype(jnp.float32)

    flops = 2 * b8 * (in_p * hid_p + hid_p * out_p)
    transcendentals = b8 * hid_p
    bytes_accessed = (b8 * in_p * xbytes
                      + (in_p * hid_p + hid_p * out_p) * cds
                      + (hid_p + out_p) * 4
                      + b8 * out_p * obytes)

    # Conservative 'needed' covers the double-buffered-weights fallback too.
    needed = 2 * resident + tb * per_row
    vmem_limit_bytes = int(min(max(needed + (4 << 20), 32 << 20), vmem_budget))

    def build(single_buffer_weights):
        wkw = dict(pipeline_mode=pl.Buffered(1)) if single_buffer_weights else {}
        in_specs = [
            pl.BlockSpec((tb, in_p), lambda i: (i, 0)),              # streamed batch tile
            pl.BlockSpec((in_p, hid_p), lambda i: (0, 0), **wkw),    # VMEM-resident weights
            pl.BlockSpec((1, hid_p), lambda i: (0, 0), **wkw),
            pl.BlockSpec((hid_p, out_p), lambda i: (0, 0), **wkw),
            pl.BlockSpec((1, out_p), lambda i: (0, 0), **wkw),
        ]
        return pl.pallas_call(
            ffnn_tanh_kernel,
            out_shape=jax.ShapeDtypeStruct((b8, out_p), out_dtype),
            grid=(num_tiles,),
            in_specs=in_specs,
            out_specs=pl.BlockSpec((tb, out_p), lambda i: (i, 0)),
            compiler_params=pltpu.CompilerParams(
                dimension_semantics=("parallel",),
                vmem_limit_bytes=vmem_limit_bytes,
            ),
            cost_estimate=pl.CostEstimate(
                flops=flops,
                transcendentals=transcendentals,
                bytes_accessed=bytes_accessed,
            ),
        )

    try:
        out_padded = build(single_buffer_weights=True)(xp, w1p, b1p, w2p, b2p)
    except Exception:
        # Fallback: let Pallas default-double-buffer the constant-index weight blocks.
        out_padded = build(single_buffer_weights=False)(xp, w1p, b1p, w2p, b2p)

    # Padded batch rows hold tanh(b1)@W2+b2 garbage; slice them (and lane padding) off.
    # out_dtype == x.dtype, so this slice is the only post-kernel op (no cast pass).
    return out_padded[:B, :out_dim]


def init_linear_params(key, fan_in, fan_out, dtype=jnp.float32):
    # Deterministic init mimicking torch.nn.Linear: U(-1/sqrt(fan_in), 1/sqrt(fan_in)).
    kw, kb = jax.random.split(key)
    bound = 1.0 / jnp.sqrt(jnp.asarray(fan_in, dtype))
    w = jax.random.uniform(kw, (fan_in, fan_out), dtype, -bound, bound)
    b = jax.random.uniform(kb, (1, fan_out), dtype, -bound, bound)
    return w, b


def ffnn_tanh_ref(x, w1, b1, w2, b2, compute_dtype=jnp.float32):
    # Pure-JAX reference with the same operand-dtype policy as the kernel.
    xc = x.astype(compute_dtype)
    w1c = w1.astype(compute_dtype)
    w2c = w2.astype(compute_dtype)
    h = jnp.tanh(jnp.dot(xc, w1c, preferred_element_type=jnp.float32)
                 + b1.astype(jnp.float32))
    y = (jnp.dot(h.astype(compute_dtype), w2c, preferred_element_type=jnp.float32)
         + b2.astype(jnp.float32))
    return y


if __name__ == "__main__":
    input_dim, hidden_dim, output_dim = 32, 64, 16
    batch = 8

    key = jax.random.PRNGKey(0)
    kx, k1, k2 = jax.random.split(key, 3)

    x = jax.random.normal(kx, (batch, input_dim), jnp.float32)
    w1, b1 = init_linear_params(k1, input_dim, hidden_dim)
    w2, b2 = init_linear_params(k2, hidden_dim, output_dim)

    out = ffnn_tanh(x, w1, b1, w2, b2)
    out = jax.block_until_ready(out)
    assert out.shape == (batch, output_dim)
    assert out.dtype == x.dtype

    # Tight check against a reference using the same bf16 MXU operand casts.
    ref_bf16 = ffnn_tanh_ref(x, w1, b1, w2, b2, compute_dtype=jnp.bfloat16)
    assert jnp.allclose(out, ref_bf16, atol=1e-3, rtol=1e-3)

    # Loose sanity check against the full-f32 math (bounds bf16 operand error).
    ref_f32 = ffnn_tanh_ref(x, w1, b1, w2, b2, compute_dtype=jnp.float32)
    assert jnp.allclose(out, ref_f32, atol=5e-2, rtol=5e-2)

    print("KERNEL_OK")
</pallas_src>

<mosaic_0001>
module attributes {stable_mosaic.version = 11 : i64} {
  func.func @ffnn_tanh_kernel(%arg0: i32, %arg1: memref<8x32xf32, #tpu.memory_space<vmem>>, %arg2: memref<32x128xbf16, #tpu.memory_space<vmem>>, %arg3: memref<1x128xf32, #tpu.memory_space<vmem>>, %arg4: memref<128x128xbf16, #tpu.memory_space<vmem>>, %arg5: memref<1x128xf32, #tpu.memory_space<vmem>>, %arg6: memref<8x128xf32, #tpu.memory_space<vmem>>) attributes {dimension_semantics = [#tpu.dimension_semantics<parallel>], iteration_bounds = array<i64: 1>, scalar_prefetch = 0 : i64, scratch_operands = 0 : i64, tpu.core_type = #tpu.core_type<tc>, window_params = [{transform_indices = @transform_0, window_bounds = array<i64: 8, 32>}, {pipeline_mode = #tpu.pipeline_mode<synchronous>, transform_indices = @transform_1, window_bounds = array<i64: 32, 128>}, {pipeline_mode = #tpu.pipeline_mode<synchronous>, transform_indices = @transform_2, window_bounds = array<i64: 1, 128>}, {pipeline_mode = #tpu.pipeline_mode<synchronous>, transform_indices = @transform_3, window_bounds = array<i64: 128, 128>}, {pipeline_mode = #tpu.pipeline_mode<synchronous>, transform_indices = @transform_4, window_bounds = array<i64: 1, 128>}, {transform_indices = @transform_5, window_bounds = array<i64: 8, 128>}]} {
    %c0 = arith.constant 0 : index
    %c0_0 = arith.constant 0 : index
    %0 = vector.load %arg1[%c0, %c0_0] : memref<8x32xf32, #tpu.memory_space<vmem>>, vector<8x32xf32>
    %1 = arith.truncf %0 : vector<8x32xf32> to vector<8x32xbf16>
    %c0_1 = arith.constant 0 : index
    %c0_2 = arith.constant 0 : index
    %2 = vector.load %arg2[%c0_1, %c0_2] : memref<32x128xbf16, #tpu.memory_space<vmem>>, vector<32x128xbf16>
    %cst = arith.constant dense<0.000000e+00> : vector<8x128xf32>
    %3 = tpu.matmul %1, %2, %cst {dimension_numbers = #tpu.dot_dimension_numbers<[1], [0], [0], [1], [0, 0, 1, 1], [], []>} : vector<8x32xbf16>, vector<32x128xbf16>, vector<8x128xf32> -> vector<8x128xf32>
    %c0_3 = arith.constant 0 : index
    %c0_4 = arith.constant 0 : index
    %4 = vector.load %arg3[%c0_3, %c0_4] : memref<1x128xf32, #tpu.memory_space<vmem>>, vector<1x128xf32>
    %5 = vector.broadcast %4 : vector<1x128xf32> to vector<8x128xf32>
    %6 = arith.addf %3, %5 : vector<8x128xf32>
    %7 = math.tanh %6 : vector<8x128xf32>
    %8 = arith.truncf %7 : vector<8x128xf32> to vector<8x128xbf16>
    %c0_5 = arith.constant 0 : index
    %c0_6 = arith.constant 0 : index
    %9 = vector.load %arg4[%c0_5, %c0_6] : memref<128x128xbf16, #tpu.memory_space<vmem>>, vector<128x128xbf16>
    %cst_7 = arith.constant dense<0.000000e+00> : vector<8x128xf32>
    %10 = tpu.matmul %8, %9, %cst_7 {dimension_numbers = #tpu.dot_dimension_numbers<[1], [0], [0], [1], [0, 0, 1, 1], [], []>} : vector<8x128xbf16>, vector<128x128xbf16>, vector<8x128xf32> -> vector<8x128xf32>
    %c0_8 = arith.constant 0 : index
    %c0_9 = arith.constant 0 : index
    %11 = vector.load %arg5[%c0_8, %c0_9] : memref<1x128xf32, #tpu.memory_space<vmem>>, vector<1x128xf32>
    %12 = vector.broadcast %11 : vector<1x128xf32> to vector<8x128xf32>
    %13 = arith.addf %10, %12 : vector<8x128xf32>
    %c0_10 = arith.constant 0 : index
    %c0_11 = arith.constant 0 : index
    %14 = vector.load %arg6[%c0_10, %c0_11] : memref<8x128xf32, #tpu.memory_space<vmem>>, vector<8x128xf32>
    tpu.vector_store %arg6[%c0_10, %c0_11], %13 {strides = array<i32>} : memref<8x128xf32, #tpu.memory_space<vmem>>, vector<8x128xf32>,
    return
  }
  func.func @transform_0(%arg0: i32) -> (i32, i32) {
    %c0_i32 = arith.constant 0 : i32
    %c0_i32_0 = arith.constant 0 : i32
    return %arg0, %c0_i32 : i32, i32
  }
  func.func @transform_1(%arg0: i32) -> (i32, i32) {
    %c0_i32 = arith.constant 0 : i32
    %c0_i32_0 = arith.constant 0 : i32
    %c0_i32_1 = arith.constant 0 : i32
    return %c0_i32, %c0_i32_0 : i32, i32
  }
  func.func @transform_2(%arg0: i32) -> (i32, i32) {
    %c0_i32 = arith.constant 0 : i32
    %c0_i32_0 = arith.constant 0 : i32
    %c0_i32_1 = arith.constant 0 : i32
    return %c0_i32, %c0_i32_0 : i32, i32
  }
  func.func @transform_3(%arg0: i32) -> (i32, i32) {
    %c0_i32 = arith.constant 0 : i32
    %c0_i32_0 = arith.constant 0 : i32
    %c0_i32_1 = arith.constant 0 : i32
    return %c0_i32, %c0_i32_0 : i32, i32
  }
  func.func @transform_4(%arg0: i32) -> (i32, i32) {
    %c0_i32 = arith.constant 0 : i32
    %c0_i32_0 = arith.constant 0 : i32
    %c0_i32_1 = arith.constant 0 : i32
    return %c0_i32, %c0_i32_0 : i32, i32
  }
  func.func @transform_5(%arg0: i32) -> (i32, i32) {
    %c0_i32 = arith.constant 0 : i32
    %c0_i32_0 = arith.constant 0 : i32
    return %arg0, %c0_i32 : i32, i32
  }
}

module attributes {stable_mosaic.version = 11 : i64} {
  func.func @ffnn_tanh_kernel(%arg0: i32, %arg1: memref<8x32xf32, #tpu.memory_space<vmem>>, %arg2: memref<32x128xbf16, #tpu.memory_space<vmem>>, %arg3: memref<1x128xf32, #tpu.memory_space<vmem>>, %arg4: memref<128x128xbf16, #tpu.memory_space<vmem>>, %arg5: memref<1x128xf32, #tpu.memory_space<vmem>>, %arg6: memref<8x128xf32, #tpu.memory_space<vmem>>) attributes {dimension_semantics = [#tpu.dimension_semantics<parallel>], iteration_bounds = array<i64: 1>, scalar_prefetch = 0 : i64, scratch_operands = 0 : i64, tpu.core_type = #tpu.core_type<tc>, window_params = [{transform_indices = @transform_0, window_bounds = array<i64: 8, 32>}, {pipeline_mode = #tpu.pipeline_mode<synchronous>, transform_indices = @transform_1, window_bounds = array<i64: 32, 128>}, {pipeline_mode = #tpu.pipeline_mode<synchronous>, transform_indices = @transform_2, window_bounds = array<i64: 1, 128>}, {pipeline_mode = #tpu.pipeline_mode<synchronous>, transform_indices = @transform_3, window_bounds = array<i64: 128, 128>}, {pipeline_mode = #tpu.pipeline_mode<synchronous>, transform_indices = @transform_4, window_bounds = array<i64: 1, 128>}, {transform_indices = @transform_5, window_bounds = array<i64: 8, 128>}]} {
    %c0 = arith.constant 0 : index
    %c0_0 = arith.constant 0 : index
    %0 = vector.load %arg1[%c0, %c0_0] : memref<8x32xf32, #tpu.memory_space<vmem>>, vector<8x32xf32>
    %1 = arith.truncf %0 : vector<8x32xf32> to vector<8x32xbf16>
    %c0_1 = arith.constant 0 : index
    %c0_2 = arith.constant 0 : index
    %2 = vector.load %arg2[%c0_1, %c0_2] : memref<32x128xbf16, #tpu.memory_space<vmem>>, vector<32x128xbf16>
    %cst = arith.constant dense<0.000000e+00> : vector<8x128xf32>
    %3 = tpu.matmul %1, %2, %cst {dimension_numbers = #tpu.dot_dimension_numbers<[1], [0], [0], [1], [0, 0, 1, 1], [], []>} : vector<8x32xbf16>, vector<32x128xbf16>, vector<8x128xf32> -> vector<8x128xf32>
    %c0_3 = arith.constant 0 : index
    %c0_4 = arith.constant 0 : index
    %4 = vector.load %arg3[%c0_3, %c0_4] : memref<1x128xf32, #tpu.memory_space<vmem>>, vector<1x128xf32>
    %5 = vector.broadcast %4 : vector<1x128xf32> to vector<8x128xf32>
    %6 = arith.addf %3, %5 : vector<8x128xf32>
    %7 = math.tanh %6 : vector<8x128xf32>
    %8 = arith.truncf %7 : vector<8x128xf32> to vector<8x128xbf16>
    %c0_5 = arith.constant 0 : index
    %c0_6 = arith.constant 0 : index
    %9 = vector.load %arg4[%c0_5, %c0_6] : memref<128x128xbf16, #tpu.memory_space<vmem>>, vector<128x128xbf16>
    %cst_7 = arith.constant dense<0.000000e+00> : vector<8x128xf32>
    %10 = tpu.matmul %8, %9, %cst_7 {dimension_numbers = #tpu.dot_dimension_numbers<[1], [0], [0], [1], [0, 0, 1, 1], [], []>} : vector<8x128xbf16>, vector<128x128xbf16>, vector<8x128xf32> -> vector<8x128xf32>
    %c0_8 = arith.constant 0 : index
    %c0_9 = arith.constant 0 : index
    %11 = vector.load %arg5[%c0_8, %c0_9] : memref<1x128xf32, #tpu.memory_space<vmem>>, vector<1x128xf32>
    %12 = vector.broadcast %11 : vector<1x128xf32> to vector<8x128xf32>
    %13 = arith.addf %10, %12 : vector<8x128xf32>
    %c0_10 = arith.constant 0 : index
    %c0_11 = arith.constant 0 : index
    %14 = vector.load %arg6[%c0_10, %c0_11] : memref<8x128xf32, #tpu.memory_space<vmem>>, vector<8x128xf32>
    tpu.vector_store %arg6[%c0_10, %c0_11], %13 {strides = array<i32>} : memref<8x128xf32, #tpu.memory_space<vmem>>, vector<8x128xf32>,
    return
  }
  func.func @transform_0(%arg0: i32) -> (i32, i32) {
    %c0_i32 = arith.constant 0 : i32
    %c0_i32_0 = arith.constant 0 : i32
    return %arg0, %c0_i32 : i32, i32
  }
  func.func @transform_1(%arg0: i32) -> (i32, i32) {
    %c0_i32 = arith.constant 0 : i32
    %c0_i32_0 = arith.constant 0 : i32
    %c0_i32_1 = arith.constant 0 : i32
    return %c0_i32, %c0_i32_0 : i32, i32
  }
  func.func @transform_2(%arg0: i32) -> (i32, i32) {
    %c0_i32 = arith.constant 0 : i32
    %c0_i32_0 = arith.constant 0 : i32
    %c0_i32_1 = arith.constant 0 : i32
    return %c0_i32, %c0_i32_0 : i32, i32
  }
  func.func @transform_3(%arg0: i32) -> (i32, i32) {
    %c0_i32 = arith.constant 0 : i32
    %c0_i32_0 = arith.constant 0 : i32
    %c0_i32_1 = arith.constant 0 : i32
    return %c0_i32, %c0_i32_0 : i32, i32
  }
  func.func @transform_4(%arg0: i32) -> (i32, i32) {
    %c0_i32 = arith.constant 0 : i32
    %c0_i32_0 = arith.constant 0 : i32
    %c0_i32_1 = arith.constant 0 : i32
    return %c0_i32, %c0_i32_0 : i32, i32
  }
  func.func @transform_5(%arg0: i32) -> (i32, i32) {
    %c0_i32 = arith.constant 0 : i32
    %c0_i32_0 = arith.constant 0 : i32
    return %arg0, %c0_i32 : i32, i32
  }
}

</mosaic_0001>

<llo_original>
// kernel: tpu_custom_call.1
$region0: #{tpu_custom_call.1}
  #allocation0 [shape = 'u32[]', space=smem, size = 0x4, offset = 0x4, fixed_abs, tag = 'smem constant byte address 0x4 - core index']
  #allocation1 [shape = 'u32[144,128]{1,0:T(1,128)}', space=vmem, size = 0x12000, scoped, tag = 'internal scratch']
  %s0 = inlined_call_operand.hbm [shape: f32[8,32], index: 0, kind: input, shape index: {}]
  %s1 = inlined_call_operand.hbm [shape: bf16[32,128], index: 1, kind: input, shape index: {}]
  %s2 = inlined_call_operand.vmem [shape: f32[1,128], index: 2, kind: input, shape index: {}]
  %s3 = inlined_call_operand.hbm [shape: bf16[128,128], index: 3, kind: input, shape index: {}]
  %s4 = inlined_call_operand.vmem [shape: f32[1,128], index: 4, kind: input, shape index: {}]
  %s5 = inlined_call_operand.hbm [shape: f32[8,128], index: 5, kind: output, shape index: {}]
  %s6 = sld [smem:[#allocation0]]
  $region42: #{tpu_custom_call.1} parent=0
    _
  %s8 = ssub.s32 1, %s6
  %s9 = scalar_select 0, %s8, %s6
  $region1: #{tpu_custom_call.1} parent=0
    #allocation2 [shape = 'u8[4096]{0}', space=vmem, size = 0x1000, scoped, tag = 'input window, operand 0, single buffered']
    #allocation3 [shape = 's32[1]{0}', space=sflag, size = 0x4, scoped, tag = 'scoped memory for tpu_custom_call.1']
    #allocation4 [shape = 's32[1]{0}', space=sflag, size = 0x4, scoped, tag = 'scoped memory for tpu_custom_call.1']
    #allocation5 [shape = 'u8[8192]{0}', space=vmem, size = 0x2000, scoped, tag = 'input window, operand 1, single buffered']
    #allocation6 [shape = 's32[1]{0}', space=sflag, size = 0x4, scoped, tag = 'scoped memory for tpu_custom_call.1']
    #allocation7 [shape = 'u8[32768]{0}', space=vmem, size = 0x8000, scoped, tag = 'input window, operand 3, single buffered']
    #allocation8 [shape = 'u8[4096]{0}', space=vmem, size = 0x1000, scoped, tag = 'output window, operand 0, single buffered']
    %10 = vsyncpa [#allocation3], 0
    %11 = vsyncpa [#allocation6], 0
    %12 = vsyncpa [#allocation4], 0
    // Predicated region
    $region2: #{tpu_custom_call.1} parent=1 // pred_check
      _
    $region3: #{tpu_custom_call.1} parent=1 // pred_check_branch
      %14 = sbr.rel (0) target = $region5
    $region4: #{tpu_custom_call.1} parent=1 // pred_region
      %s16 = ssub.s32 128, 128
      %17 = vsyncadd [#allocation3], %s16
      %s19 = sshll.u32 [#allocation2], 4
      %s20 = int_to_ptr.vmem [resolvable:$true] %s19
      %22 = dma.hbm_to_vmem [thread:$0]  %s0, 128, %s20, [#allocation3]
    $region5: #{tpu_custom_call.1} parent=1 // pred_fallthru
      _
    // Predicated region
    $region6: #{tpu_custom_call.1} parent=1 // pred_check
      _
    $region7: #{tpu_custom_call.1} parent=1 // pred_check_branch
      %24 = sbr.rel (0) target = $region9
    $region8: #{tpu_custom_call.1} parent=1 // pred_region
      %s26 = ssub.s32 256, 256
      %27 = vsyncadd [#allocation6], %s26
      %s28 = sshll.u32 [#allocation5], 4
      %s29 = int_to_ptr.vmem [resolvable:$true] %s28
      %34 = dma.hbm_to_vmem [thread:$0]  %s1, 256, %s29, [#allocation6], 64, 64, 4
    $region9: #{tpu_custom_call.1} parent=1 // pred_fallthru
      _
    // Predicated region
    $region10: #{tpu_custom_call.1} parent=1 // pred_check
      _
    $region11: #{tpu_custom_call.1} parent=1 // pred_check_branch
      %36 = sbr.rel (0) target = $region13
    $region12: #{tpu_custom_call.1} parent=1 // pred_region
      _
    $region13: #{tpu_custom_call.1} parent=1 // pred_fallthru
      _
    // Predicated region
    $region14: #{tpu_custom_call.1} parent=1 // pred_check
      _
    $region15: #{tpu_custom_call.1} parent=1 // pred_check_branch
      %38 = sbr.rel (0) target = $region17
    $region16: #{tpu_custom_call.1} parent=1 // pred_region
      %s40 = ssub.s32 1024, 1024
      %41 = vsyncadd [#allocation6], %s40
      %s42 = sshll.u32 [#allocation7], 4
      %s43 = int_to_ptr.vmem [resolvable:$true] %s42
      %48 = dma.hbm_to_vmem [thread:$0]  %s3, 1024, %s43, [#allocation6], 64, 64, 4
    $region17: #{tpu_custom_call.1} parent=1 // pred_fallthru
      _
    // Predicated region
    $region18: #{tpu_custom_call.1} parent=1 // pred_check
      _
    $region19: #{tpu_custom_call.1} parent=1 // pred_check_branch
      %50 = sbr.rel (0) target = $region21
    $region20: #{tpu_custom_call.1} parent=1 // pred_region
      _
    $region21: #{tpu_custom_call.1} parent=1 // pred_fallthru
      _
    // Predicated region
    $region22: #{tpu_custom_call.1} parent=1 // pred_check
      _
    $region23: #{tpu_custom_call.1} parent=1 // pred_check_branch
      %52 = sbr.rel (0) target = $region25
    $region24: #{tpu_custom_call.1} parent=1 // pred_region
      %53 = dma.done [#allocation3], 128
    $region25: #{tpu_custom_call.1} parent=1 // pred_fallthru
      _
    // Predicated region
    $region26: #{tpu_custom_call.1} parent=1 // pred_check
      _
    $region27: #{tpu_custom_call.1} parent=1 // pred_check_branch
      %55 = sbr.rel (0) target = $region29
    $region28: #{tpu_custom_call.1} parent=1 // pred_region
      %56 = dma.done [#allocation6], 256
    $region29: #{tpu_custom_call.1} parent=1 // pred_fallthru
      _
    // Predicated region
    $region30: #{tpu_custom_call.1} parent=1 // pred_check
      _
    $region31: #{tpu_custom_call.1} parent=1 // pred_check_branch
      %58 = sbr.rel (0) target = $region33
    $region32: #{tpu_custom_call.1} parent=1 // pred_region
      %59 = dma.done [#allocation6], 1024
    $region33: #{tpu_custom_call.1} parent=1 // pred_fallthru
      _
    %v61 = vld [vmem:[#allocation2] sm:$0xff]
    %v62 = vpack.c.bf16 %v61, %v61
    %v63 = vld [vmem:[#allocation5] sm:$0xf]
    %v64 = vld [vmem:[#allocation5 + $0x4] sm:$0xf]
    %v65 = vld [vmem:[#allocation5 + $0x8] sm:$0xf]
    %v66 = vld [vmem:[#allocation5 + $0xc] sm:$0xf]
    %v67 = vld [vmem:[%s2] sm:$0x1]
    %v69 = vlaneseq
    %v70 = vshrl.u32 %v69, 7
    %v71 = vsub.s32 0, %v70
    %v72 = vrot.slane %v67, %v71
    %v78 = vunpack.c.l.b16 %v63
    %v79 = vunpack.c.l.b16 %v64
    %v80 = vunpack.c.l.b16 %v65
    %v81 = vunpack.c.l.b16 %v66
    %v82 = vpack.c.b16 %v79, %v78
    %v83 = vpack.c.b16 %v81, %v80
    %vm86 = vcmask 261120
    %v88 = vsel %vm86, %v62, 0
    %90 = vmatprep.subr.bf16.mxu0 0
    %91 = vmatpush1.bf16.msra.mxu0 0
    %92 = vmatprep.subr.bf16.mxu0 0
    %93 = vmatpush1.bf16.msra.mxu0 0
    %94 = vmatprep.subr.bf16.mxu0 0
    %95 = vmatpush1.bf16.msra.mxu0 0
    %96 = vmatprep.subr.bf16.mxu0 0
    %97 = vmatpush1.bf16.msra.mxu0 0
    %98 = vmatprep.subr.bf16.mxu0 0
    %99 = vmatpush1.bf16.msra.mxu0 0
    %100 = vmatprep.subr.bf16.mxu0 0
    %101 = vmatpush1.bf16.msra.mxu0 0
    %102 = vmatprep.subr.bf16.mxu0 0
    %103 = vmatpush1.bf16.msra.mxu0 %v83
    %104 = vmatprep.subr.bf16.mxu0 0
    %105 = vmatpush1.bf16.msra.mxu0 %v82
    %106 = vmatprep.subr.bf16.mxu0 0
    %107 = vmatpush2.bf16.msra.mxu0 0
    %108 = vmatprep.subr.bf16.mxu0 0
    %109 = vmatpush2.bf16.msra.mxu0 0
    %110 = vmatprep.subr.bf16.mxu0 0
    %111 = vmatpush2.bf16.msra.mxu0 0
    %112 = vmatprep.subr.bf16.mxu0 0
    %113 = vmatpush2.bf16.msra.mxu0 0
    %114 = vmatprep.subr.bf16.mxu0 0
    %115 = vmatpush2.bf16.msra.mxu0 0
    %116 = vmatprep.subr.bf16.mxu0 0
    %117 = vmatpush2.bf16.msra.mxu0 0
    %118 = vmatprep.subr.bf16.mxu0 0
    %119 = vmatpush2.bf16.msra.mxu0 0
    %120 = vmatprep.subr.bf16.mxu0 0
    %121 = vmatpush2.bf16.msra.mxu0 0
    %122 = vmatprep.mubr.bf16.mxu0 0
    %123 = vmatmul.mubr.bf16.gmra.mxu0 %v88
    %v124 = vpop.f32.mrf.mxu0
    %v125 = vadd.f32 %v72, %v124
    %v126 = vpop.f32.mrf.mxu0
    %v127 = vpop.f32.mrf.mxu0
    %v128 = vpop.f32.mrf.mxu0
    %129 = vdwg.mxu0
    %v130 = vtanh.pop %v125
    %v131 = vpack.c.bf16 %v130, %v130
    %v132 = vld [vmem:[#allocation7] sm:$0xf]
    %v133 = vld [vmem:[#allocation7 + $0x4] sm:$0xf]
    %v134 = vld [vmem:[#allocation7 + $0x8] sm:$0xf]
    %v135 = vld [vmem:[#allocation7 + $0xc] sm:$0xf]
    %v136 = vld [vmem:[#allocation7 + $0x10] sm:$0xf]
    %v137 = vld [vmem:[#allocation7 + $0x14] sm:$0xf]
    %v138 = vld [vmem:[#allocation7 + $0x18] sm:$0xf]
    %v139 = vld [vmem:[#allocation7 + $0x1c] sm:$0xf]
    %v140 = vld [vmem:[#allocation7 + $0x20] sm:$0xf]
    %v141 = vld [vmem:[#allocation7 + $0x24] sm:$0xf]
    %v142 = vld [vmem:[#allocation7 + $0x28] sm:$0xf]
    %v143 = vld [vmem:[#allocation7 + $0x2c] sm:$0xf]
    %v144 = vld [vmem:[#allocation7 + $0x30] sm:$0xf]
    %v145 = vld [vmem:[#allocation7 + $0x34] sm:$0xf]
    %v146 = vld [vmem:[#allocation7 + $0x38] sm:$0xf]
    %v147 = vld [vmem:[#allocation7 + $0x3c] sm:$0xf]
    %v148 = vld [vmem:[%s4] sm:$0x1]
    %v150 = vlaneseq
    %v151 = vshrl.u32 %v150, 7
    %v152 = vsub.s32 0, %v151
    %v153 = vrot.slane %v148, %v152
    %v171 = vunpack.c.l.b16 %v132
    %v172 = vunpack.c.l.b16 %v133
    %v173 = vunpack.c.l.b16 %v134
    %v174 = vunpack.c.l.b16 %v135
    %v175 = vunpack.c.l.b16 %v136
    %v176 = vunpack.c.l.b16 %v137
    %v177 = vunpack.c.l.b16 %v138
    %v178 = vunpack.c.l.b16 %v139
    %v179 = vunpack.c.l.b16 %v140
    %v180 = vunpack.c.l.b16 %v141
    %v181 = vunpack.c.l.b16 %v142
    %v182 = vunpack.c.l.b16 %v143
    %v183 = vunpack.c.l.b16 %v144
    %v184 = vunpack.c.l.b16 %v145
    %v185 = vunpack.c.l.b16 %v146
    %v186 = vunpack.c.l.b16 %v147
    %v187 = vpack.c.b16 %v172, %v171
    %v188 = vpack.c.b16 %v174, %v173
    %v189 = vpack.c.b16 %v176, %v175
    %v190 = vpack.c.b16 %v178, %v177
    %v191 = vpack.c.b16 %v180, %v179
    %v192 = vpack.c.b16 %v182, %v181
    %v193 = vpack.c.b16 %v184, %v183
    %v194 = vpack.c.b16 %v186, %v185
    %203 = vmatprep.subr.bf16.mxu0 0
    %204 = vmatpush1.bf16.msra.mxu0 %v194
    %205 = vmatprep.subr.bf16.mxu0 0
    %206 = vmatpush1.bf16.msra.mxu0 %v193
    %207 = vmatprep.subr.bf16.mxu0 0
    %208 = vmatpush1.bf16.msra.mxu0 %v192
    %209 = vmatprep.subr.bf16.mxu0 0
    %210 = vmatpush1.bf16.msra.mxu0 %v191
    %211 = vmatprep.subr.bf16.mxu0 0
    %212 = vmatpush1.bf16.msra.mxu0 %v190
    %213 = vmatprep.subr.bf16.mxu0 0
    %214 = vmatpush1.bf16.msra.mxu0 %v189
    %215 = vmatprep.subr.bf16.mxu0 0
    %216 = vmatpush1.bf16.msra.mxu0 %v188
    %217 = vmatprep.subr.bf16.mxu0 0
    %218 = vmatpush1.bf16.msra.mxu0 %v187
    %219 = vmatprep.subr.bf16.mxu0 0
    %220 = vmatpush2.bf16.msra.mxu0 0
    %221 = vmatprep.subr.bf16.mxu0 0
    %222 = vmatpush2.bf16.msra.mxu0 0
    %223 = vmatprep.subr.bf16.mxu0 0
    %224 = vmatpush2.bf16.msra.mxu0 0
    %225 = vmatprep.subr.bf16.mxu0 0
    %226 = vmatpush2.bf16.msra.mxu0 0
    %227 = vmatprep.subr.bf16.mxu0 0
    %228 = vmatpush2.bf16.msra.mxu0 0
    %229 = vmatprep.subr.bf16.mxu0 0
    %230 = vmatpush2.bf16.msra.mxu0 0
    %231 = vmatprep.subr.bf16.mxu0 0
    %232 = vmatpush2.bf16.msra.mxu0 0
    %233 = vmatprep.subr.bf16.mxu0 0
    %234 = vmatpush2.bf16.msra.mxu0 0
    %235 = vmatprep.mubr.bf16.mxu0 0
    %236 = vmatmul.mubr.bf16.gmra.mxu0 %v131
    %v237 = vpop.f32.mrf.mxu0
    %v238 = vadd.f32 %v153, %v237
    %v239 = vpop.f32.mrf.mxu0
    %v240 = vpop.f32.mrf.mxu0
    %v241 = vpop.f32.mrf.mxu0
    %242 = vdwg.mxu0
    %243 = vst [vmem:[#allocation8] sm:$0xff] %v238
    // Predicated region
    $region34: #{tpu_custom_call.1} parent=1 // pred_check
      _
    $region35: #{tpu_custom_call.1} parent=1 // pred_check_branch
      %245 = sbr.rel (0) target = $region37
    $region36: #{tpu_custom_call.1} parent=1 // pred_region
      %s247 = ssub.s32 128, 128
      %248 = vsyncadd [#allocation4], %s247
      %s250 = sshll.u32 [#allocation8], 4
      %s251 = int_to_ptr.vmem [resolvable:$true] %s250
      %253 = dma.vmem_to_hbm [thread:$0]  %s251, 128, %s5, [#allocation4]
    $region37: #{tpu_custom_call.1} parent=1 // pred_fallthru
      _
    // Predicated region
    $region38: #{tpu_custom_call.1} parent=1 // pred_check
      _
    $region39: #{tpu_custom_call.1} parent=1 // pred_check_branch
      %255 = sbr.rel (0) target = $region41
    $region40: #{tpu_custom_call.1} parent=1 // pred_region
      %256 = dma.done [#allocation4], 128
    $region41: #{tpu_custom_call.1} parent=1 // pred_fallthru
      _
    %257 = vsyncpa [#allocation3], 1
    %258 = vsyncpa [#allocation6], 1
    %259 = vsyncpa [#allocation4], 1

// kernel: tpu_custom_call.1
$region0: #{tpu_custom_call.1}
  #allocation0 [shape = 'u32[]', space=smem, size = 0x4, offset = 0x4, fixed_abs, tag = 'smem constant byte address 0x4 - core index']
  #allocation1 [shape = 'u32[144,128]{1,0:T(1,128)}', space=vmem, size = 0x12000, scoped, tag = 'internal scratch']
  %s0 = inlined_call_operand.hbm [shape: f32[8,32], index: 0, kind: input, shape index: {}]
  %s1 = inlined_call_operand.hbm [shape: bf16[32,128], index: 1, kind: input, shape index: {}]
  %s2 = inlined_call_operand.vmem [shape: f32[1,128], index: 2, kind: input, shape index: {}]
  %s3 = inlined_call_operand.hbm [shape: bf16[128,128], index: 3, kind: input, shape index: {}]
  %s4 = inlined_call_operand.vmem [shape: f32[1,128], index: 4, kind: input, shape index: {}]
  %s5 = inlined_call_operand.hbm [shape: f32[8,128], index: 5, kind: output, shape index: {}]
  %s6 = sld [smem:[#allocation0]]
  $region42: #{tpu_custom_call.1} parent=0
    _
  %s8 = ssub.s32 1, %s6
  %s9 = scalar_select 0, %s8, %s6
  $region1: #{tpu_custom_call.1} parent=0
    #allocation2 [shape = 'u8[4096]{0}', space=vmem, size = 0x1000, scoped, tag = 'input window, operand 0, single buffered']
    #allocation3 [shape = 's32[1]{0}', space=sflag, size = 0x4, scoped, tag = 'scoped memory for tpu_custom_call.1']
    #allocation4 [shape = 's32[1]{0}', space=sflag, size = 0x4, scoped, tag = 'scoped memory for tpu_custom_call.1']
    #allocation5 [shape = 'u8[8192]{0}', space=vmem, size = 0x2000, scoped, tag = 'input window, operand 1, single buffered']
    #allocation6 [shape = 's32[1]{0}', space=sflag, size = 0x4, scoped, tag = 'scoped memory for tpu_custom_call.1']
    #allocation7 [shape = 'u8[32768]{0}', space=vmem, size = 0x8000, scoped, tag = 'input window, operand 3, single buffered']
    #allocation8 [shape = 'u8[4096]{0}', space=vmem, size = 0x1000, scoped, tag = 'output window, operand 0, single buffered']
    %10 = vsyncpa [#allocation3], 0
    %11 = vsyncpa [#allocation6], 0
    %12 = vsyncpa [#allocation4], 0
    // Predicated region
    $region2: #{tpu_custom_call.1} parent=1 // pred_check
      _
    $region3: #{tpu_custom_call.1} parent=1 // pred_check_branch
      %14 = sbr.rel (0) target = $region5
    $region4: #{tpu_custom_call.1} parent=1 // pred_region
      %s16 = ssub.s32 128, 128
      %17 = vsyncadd [#allocation3], %s16
      %s19 = sshll.u32 [#allocation2], 4
      %s20 = int_to_ptr.vmem [resolvable:$true] %s19
      %22 = dma.hbm_to_vmem [thread:$0]  %s0, 128, %s20, [#allocation3]
    $region5: #{tpu_custom_call.1} parent=1 // pred_fallthru
      _
    // Predicated region
    $region6: #{tpu_custom_call.1} parent=1 // pred_check
      _
    $region7: #{tpu_custom_call.1} parent=1 // pred_check_branch
      %24 = sbr.rel (0) target = $region9
    $region8: #{tpu_custom_call.1} parent=1 // pred_region
      %s26 = ssub.s32 256, 256
      %27 = vsyncadd [#allocation6], %s26
      %s28 = sshll.u32 [#allocation5], 4
      %s29 = int_to_ptr.vmem [resolvable:$true] %s28
      %34 = dma.hbm_to_vmem [thread:$0]  %s1, 256, %s29, [#allocation6], 64, 64, 4
    $region9: #{tpu_custom_call.1} parent=1 // pred_fallthru
      _
    // Predicated region
    $region10: #{tpu_custom_call.1} parent=1 // pred_check
      _
    $region11: #{tpu_custom_call.1} parent=1 // pred_check_branch
      %36 = sbr.rel (0) target = $region13
    $region12: #{tpu_custom_call.1} parent=1 // pred_region
      _
    $region13: #{tpu_custom_call.1} parent=1 // pred_fallthru
      _
    // Predicated region
    $region14: #{tpu_custom_call.1} parent=1 // pred_check
      _
    $region15: #{tpu_custom_call.1} parent=1 // pred_check_branch
      %38 = sbr.rel (0) target = $region17
    $region16: #{tpu_custom_call.1} parent=1 // pred_region
      %s40 = ssub.s32 1024, 1024
      %41 = vsyncadd [#allocation6], %s40
      %s42 = sshll.u32 [#allocation7], 4
      %s43 = int_to_ptr.vmem [resolvable:$true] %s42
      %48 = dma.hbm_to_vmem [thread:$0]  %s3, 1024, %s43, [#allocation6], 64, 64, 4
    $region17: #{tpu_custom_call.1} parent=1 // pred_fallthru
      _
    // Predicated region
    $region18: #{tpu_custom_call.1} parent=1 // pred_check
      _
    $region19: #{tpu_custom_call.1} parent=1 // pred_check_branch
      %50 = sbr.rel (0) target = $region21
    $region20: #{tpu_custom_call.1} parent=1 // pred_region
      _
    $region21: #{tpu_custom_call.1} parent=1 // pred_fallthru
      _
    // Predicated region
    $region22: #{tpu_custom_call.1} parent=1 // pred_check
      _
    $region23: #{tpu_custom_call.1} parent=1 // pred_check_branch
      %52 = sbr.rel (0) target = $region25
    $region24: #{tpu_custom_call.1} parent=1 // pred_region
      %53 = dma.done [#allocation3], 128
    $region25: #{tpu_custom_call.1} parent=1 // pred_fallthru
      _
    // Predicated region
    $region26: #{tpu_custom_call.1} parent=1 // pred_check
      _
    $region27: #{tpu_custom_call.1} parent=1 // pred_check_branch
      %55 = sbr.rel (0) target = $region29
    $region28: #{tpu_custom_call.1} parent=1 // pred_region
      %56 = dma.done [#allocation6], 256
    $region29: #{tpu_custom_call.1} parent=1 // pred_fallthru
      _
    // Predicated region
    $region30: #{tpu_custom_call.1} parent=1 // pred_check
      _
    $region31: #{tpu_custom_call.1} parent=1 // pred_check_branch
      %58 = sbr.rel (0) target = $region33
    $region32: #{tpu_custom_call.1} parent=1 // pred_region
      %59 = dma.done [#allocation6], 1024
    $region33: #{tpu_custom_call.1} parent=1 // pred_fallthru
      _
    %v61 = vld [vmem:[#allocation2] sm:$0xff]
    %v62 = vpack.c.bf16 %v61, %v61
    %v63 = vld [vmem:[#allocation5] sm:$0xf]
    %v64 = vld [vmem:[#allocation5 + $0x4] sm:$0xf]
    %v65 = vld [vmem:[#allocation5 + $0x8] sm:$0xf]
    %v66 = vld [vmem:[#allocation5 + $0xc] sm:$0xf]
    %v67 = vld [vmem:[%s2] sm:$0x1]
    %v69 = vlaneseq
    %v70 = vshrl.u32 %v69, 7
    %v71 = vsub.s32 0, %v70
    %v72 = vrot.slane %v67, %v71
    %v78 = vunpack.c.l.b16 %v63
    %v79 = vunpack.c.l.b16 %v64
    %v80 = vunpack.c.l.b16 %v65
    %v81 = vunpack.c.l.b16 %v66
    %v82 = vpack.c.b16 %v79, %v78
    %v83 = vpack.c.b16 %v81, %v80
    %vm86 = vcmask 261120
    %v88 = vsel %vm86, %v62, 0
    %90 = vmatprep.subr.bf16.mxu0 0
    %91 = vmatpush1.bf16.msra.mxu0 0
    %92 = vmatprep.subr.bf16.mxu0 0
    %93 = vmatpush1.bf16.msra.mxu0 0
    %94 = vmatprep.subr.bf16.mxu0 0
    %95 = vmatpush1.bf16.msra.mxu0 0
    %96 = vmatprep.subr.bf16.mxu0 0
    %97 = vmatpush1.bf16.msra.mxu0 0
    %98 = vmatprep.subr.bf16.mxu0 0
    %99 = vmatpush1.bf16.msra.mxu0 0
    %100 = vmatprep.subr.bf16.mxu0 0
    %101 = vmatpush1.bf16.msra.mxu0 0
    %102 = vmatprep.subr.bf16.mxu0 0
    %103 = vmatpush1.bf16.msra.mxu0 %v83
    %104 = vmatprep.subr.bf16.mxu0 0
    %105 = vmatpush1.bf16.msra.mxu0 %v82
    %106 = vmatprep.subr.bf16.mxu0 0
    %107 = vmatpush2.bf16.msra.mxu0 0
    %108 = vmatprep.subr.bf16.mxu0 0
    %109 = vmatpush2.bf16.msra.mxu0 0
    %110 = vmatprep.subr.bf16.mxu0 0
    %111 = vmatpush2.bf16.msra.mxu0 0
    %112 = vmatprep.subr.bf16.mxu0 0
    %113 = vmatpush2.bf16.msra.mxu0 0
    %114 = vmatprep.subr.bf16.mxu0 0
    %115 = vmatpush2.bf16.msra.mxu0 0
    %116 = vmatprep.subr.bf16.mxu0 0
    %117 = vmatpush2.bf16.msra.mxu0 0
    %118 = vmatprep.subr.bf16.mxu0 0
    %119 = vmatpush2.bf16.msra.mxu0 0
    %120 = vmatprep.subr.bf16.mxu0 0
    %121 = vmatpush2.bf16.msra.mxu0 0
    %122 = vmatprep.mubr.bf16.mxu0 0
    %123 = vmatmul.mubr.bf16.gmra.mxu0 %v88
    %v124 = vpop.f32.mrf.mxu0
    %v125 = vadd.f32 %v72, %v124
    %v126 = vpop.f32.mrf.mxu0
    %v127 = vpop.f32.mrf.mxu0
    %v128 = vpop.f32.mrf.mxu0
    %129 = vdwg.mxu0
    %v130 = vtanh.pop %v125
    %v131 = vpack.c.bf16 %v130, %v130
    %v132 = vld [vmem:[#allocation7] sm:$0xf]
    %v133 = vld [vmem:[#allocation7 + $0x4] sm:$0xf]
    %v134 = vld [vmem:[#allocation7 + $0x8] sm:$0xf]
    %v135 = vld [vmem:[#allocation7 + $0xc] sm:$0xf]
    %v136 = vld [vmem:[#allocation7 + $0x10] sm:$0xf]
    %v137 = vld [vmem:[#allocation7 + $0x14] sm:$0xf]
    %v138 = vld [vmem:[#allocation7 + $0x18] sm:$0xf]
    %v139 = vld [vmem:[#allocation7 + $0x1c] sm:$0xf]
    %v140 = vld [vmem:[#allocation7 + $0x20] sm:$0xf]
    %v141 = vld [vmem:[#allocation7 + $0x24] sm:$0xf]
    %v142 = vld [vmem:[#allocation7 + $0x28] sm:$0xf]
    %v143 = vld [vmem:[#allocation7 + $0x2c] sm:$0xf]
    %v144 = vld [vmem:[#allocation7 + $0x30] sm:$0xf]
    %v145 = vld [vmem:[#allocation7 + $0x34] sm:$0xf]
    %v146 = vld [vmem:[#allocation7 + $0x38] sm:$0xf]
    %v147 = vld [vmem:[#allocation7 + $0x3c] sm:$0xf]
    %v148 = vld [vmem:[%s4] sm:$0x1]
    %v150 = vlaneseq
    %v151 = vshrl.u32 %v150, 7
    %v152 = vsub.s32 0, %v151
    %v153 = vrot.slane %v148, %v152
    %v171 = vunpack.c.l.b16 %v132
    %v172 = vunpack.c.l.b16 %v133
    %v173 = vunpack.c.l.b16 %v134
    %v174 = vunpack.c.l.b16 %v135
    %v175 = vunpack.c.l.b16 %v136
    %v176 = vunpack.c.l.b16 %v137
    %v177 = vunpack.c.l.b16 %v138
    %v178 = vunpack.c.l.b16 %v139
    %v179 = vunpack.c.l.b16 %v140
    %v180 = vunpack.c.l.b16 %v141
    %v181 = vunpack.c.l.b16 %v142
    %v182 = vunpack.c.l.b16 %v143
    %v183 = vunpack.c.l.b16 %v144
    %v184 = vunpack.c.l.b16 %v145
    %v185 = vunpack.c.l.b16 %v146
    %v186 = vunpack.c.l.b16 %v147
    %v187 = vpack.c.b16 %v172, %v171
    %v188 = vpack.c.b16 %v174, %v173
    %v189 = vpack.c.b16 %v176, %v175
    %v190 = vpack.c.b16 %v178, %v177
    %v191 = vpack.c.b16 %v180, %v179
    %v192 = vpack.c.b16 %v182, %v181
    %v193 = vpack.c.b16 %v184, %v183
    %v194 = vpack.c.b16 %v186, %v185
    %203 = vmatprep.subr.bf16.mxu0 0
    %204 = vmatpush1.bf16.msra.mxu0 %v194
    %205 = vmatprep.subr.bf16.mxu0 0
    %206 = vmatpush1.bf16.msra.mxu0 %v193
    %207 = vmatprep.subr.bf16.mxu0 0
    %208 = vmatpush1.bf16.msra.mxu0 %v192
    %209 = vmatprep.subr.bf16.mxu0 0
    %210 = vmatpush1.bf16.msra.mxu0 %v191
    %211 = vmatprep.subr.bf16.mxu0 0
    %212 = vmatpush1.bf16.msra.mxu0 %v190
    %213 = vmatprep.subr.bf16.mxu0 0
    %214 = vmatpush1.bf16.msra.mxu0 %v189
    %215 = vmatprep.subr.bf16.mxu0 0
    %216 = vmatpush1.bf16.msra.mxu0 %v188
    %217 = vmatprep.subr.bf16.mxu0 0
    %218 = vmatpush1.bf16.msra.mxu0 %v187
    %219 = vmatprep.subr.bf16.mxu0 0
    %220 = vmatpush2.bf16.msra.mxu0 0
    %221 = vmatprep.subr.bf16.mxu0 0
    %222 = vmatpush2.bf16.msra.mxu0 0
    %223 = vmatprep.subr.bf16.mxu0 0
    %224 = vmatpush2.bf16.msra.mxu0 0
    %225 = vmatprep.subr.bf16.mxu0 0
    %226 = vmatpush2.bf16.msra.mxu0 0
    %227 = vmatprep.subr.bf16.mxu0 0
    %228 = vmatpush2.bf16.msra.mxu0 0
    %229 = vmatprep.subr.bf16.mxu0 0
    %230 = vmatpush2.bf16.msra.mxu0 0
    %231 = vmatprep.subr.bf16.mxu0 0
    %232 = vmatpush2.bf16.msra.mxu0 0
    %233 = vmatprep.subr.bf16.mxu0 0
    %234 = vmatpush2.bf16.msra.mxu0 0
    %235 = vmatprep.mubr.bf16.mxu0 0
    %236 = vmatmul.mubr.bf16.gmra.mxu0 %v131
    %v237 = vpop.f32.mrf.mxu0
    %v238 = vadd.f32 %v153, %v237
    %v239 = vpop.f32.mrf.mxu0
    %v240 = vpop.f32.mrf.mxu0
    %v241 = vpop.f32.mrf.mxu0
    %242 = vdwg.mxu0
    %243 = vst [vmem:[#allocation8] sm:$0xff] %v238
    // Predicated region
    $region34: #{tpu_custom_call.1} parent=1 // pred_check
      _
    $region35: #{tpu_custom_call.1} parent=1 // pred_check_branch
      %245 = sbr.rel (0) target = $region37
    $region36: #{tpu_custom_call.1} parent=1 // pred_region
      %s247 = ssub.s32 128, 128
      %248 = vsyncadd [#allocation4], %s247
      %s250 = sshll.u32 [#allocation8], 4
      %s251 = int_to_ptr.vmem [resolvable:$true] %s250
      %253 = dma.vmem_to_hbm [thread:$0]  %s251, 128, %s5, [#allocation4]
    $region37: #{tpu_custom_call.1} parent=1 // pred_fallthru
      _
    // Predicated region
    $region38: #{tpu_custom_call.1} parent=1 // pred_check
      _
    $region39: #{tpu_custom_call.1} parent=1 // pred_check_branch
      %255 = sbr.rel (0) target = $region41
    $region40: #{tpu_custom_call.1} parent=1 // pred_region
      %256 = dma.done [#allocation4], 128
    $region41: #{tpu_custom_call.1} parent=1 // pred_fallthru
      _
    %257 = vsyncpa [#allocation3], 1
    %258 = vsyncpa [#allocation6], 1
    %259 = vsyncpa [#allocation4], 1

</llo_original>
